<compile_context>
chip_gen: v5e
topology: v5e:2x2
jax: 0.10.0
libtpu: 0.0.40
codegen_flags: <defaults>
</compile_context>

<pallas_src>
import functools

import jax
import jax.numpy as jnp
from jax.experimental import pallas as pl
from jax.experimental.pallas import tpu as pltpu

PC1_EPS = 1e-4  # parity with the PyTorch module (used only by predict_logit_scores)

_LANES = 128
_SUBLANES = 8
# Rows of 128 lanes streamed per grid step (2048 * 128 * 4 B = 1 MiB per operand tile).
# Double-buffered cap/bench/out tiles + 3 accumulator tiles ~= 9 MiB of VMEM, safely
# under the scoped-VMEM defaults of v5e (16 MiB) and v6e/v7x (32 MiB).
_MAX_TILE_ROWS = 2048


def _ceil_to(x: int, m: int) -> int:
    return ((x + m - 1) // m) * m


def _tile_layout(length: int, max_rows: int):
    """tile_rows / num_tiles / padded_rows for a lane-dense (rows, 128) slab."""
    rows_needed = max(_ceil_to(length, _LANES) // _LANES, 1)
    tile_rows = min(max_rows, _ceil_to(rows_needed, _SUBLANES))
    num_tiles = _ceil_to(rows_needed, tile_rows) // tile_rows
    return tile_rows, num_tiles, num_tiles * tile_rows


def _scaling_law_kernel(params_ref, bench_ref, cap_ref, out_ref,
                        sum_acc, sq_acc, maxb_acc, scale_ref, bias_ref, span_ref,
                        *, n_valid: int, t_cap: int, t_bench: int):
    sweep = pl.program_id(0)        # 0: streamed reductions, 1: streamed elementwise map
    t = pl.program_id(1)
    t_total = pl.num_programs(1)

    floor = params_ref[0]
    ceil_raw = params_ref[1]
    alpha = params_ref[2]
    beta = params_ref[3]

    # --------------- sweep 0: one-pass sum / sum-of-squares / benchmark max ---------------
    @pl.when(sweep == 0)
    def _reduce():
        @pl.when(t == 0)
        def _init():
            sum_acc[...] = jnp.zeros_like(sum_acc)
            sq_acc[...] = jnp.zeros_like(sq_acc)
            maxb_acc[...] = jnp.full_like(maxb_acc, -jnp.inf)

        # Pure VPU accumulation per tile; zero padding contributes exactly 0 to both sums.
        @pl.when(t < t_cap)
        def _acc_cap():
            x = cap_ref[...]
            sum_acc[...] = sum_acc[...] + x
            sq_acc[...] = sq_acc[...] + x * x

        # -inf padding is ignored by max.
        @pl.when(t < t_bench)
        def _acc_bench():
            maxb_acc[...] = jnp.maximum(maxb_acc[...], bench_ref[...])

        # Single cross-lane reduce + scalar algebra, folded once per call.
        @pl.when(t == t_total - 1)
        def _finalize():
            n = jnp.float32(n_valid)
            sum_x = jnp.sum(sum_acc[...], keepdims=True)    # (1, 1)
            sum_sq = jnp.sum(sq_acc[...], keepdims=True)    # (1, 1)
            max_b = jnp.max(maxb_acc[...], keepdims=True)   # (1, 1)

            mean = sum_x / n
            # Unbiased (ddof=1) variance from one-pass moments; clamp tiny negative
            # residue from fp cancellation.
            # TODO(synk): PyTorch emits NaN for std == 0 or n == 1; this limit yields
            # saturated (+/-inf logit) outputs instead of NaN in that degenerate case.
            var = jnp.maximum(sum_sq - n * mean * mean, 0.0) / (n - 1.0)
            inv_std = 1.0 / jnp.sqrt(var)

            min_ceil = jnp.clip(max_b, 0.8, 1.0)
            ceil = (1.0 - min_ceil) * jax.nn.sigmoid(jnp.full((1, 1), ceil_raw)) + min_ceil

            scale = beta * inv_std
            scale_ref[...] = scale
            bias_ref[...] = alpha - mean * scale
            span_ref[...] = ceil - floor

    # --------------- sweep 1: streamed FMA + sigmoid + FMA ---------------
    @pl.when(sweep == 1)
    def _map():
        x = cap_ref[...]
        logit = scale_ref[...] * x + bias_ref[...]
        out_ref[...] = span_ref[...] * jax.nn.sigmoid(logit) + floor


def scaling_law_forward(capability_scores, benchmark_scores, benchmark_floor,
                        benchmark_ceil_raw, alpha, beta, *,
                        max_tile_rows: int = _MAX_TILE_ROWS):
    """Pallas implementation of ScalingLaw.forward(capability_scores).

    Matches the module's train-time usage (`self(self.capability_scores)`): the
    normalisation mean/std are the ddof=1 statistics of the capability vector itself,
    and the ceiling comes from max(benchmark_scores).
    """
    cap = jnp.asarray(capability_scores, jnp.float32)
    ben = jnp.asarray(benchmark_scores, jnp.float32)
    n = int(cap.shape[0])
    m = int(ben.shape[0])

    cap_rows, t_cap, cap_pad_rows = _tile_layout(n, max_tile_rows)
    ben_rows, t_bench, ben_pad_rows = _tile_layout(m, max_tile_rows)
    t_total = max(t_cap, t_bench)

    # Lane-dense (rows, 128) slabs.  Capability pads with 0.0 (exact for the moments),
    # benchmark pads with -inf (ignored by max).
    # TODO(synk): for multi-million N, accept/return the padded (rows, 128) layout at the
    # API boundary so XLA's pad + final slice don't add an extra HBM round trip.
    # TODO(synk): accept bf16 slabs (upcast in-kernel) to halve HBM bytes when callers allow.
    cap_slab = jnp.pad(cap, (0, cap_pad_rows * _LANES - n)).reshape(cap_pad_rows, _LANES)
    ben_slab = jnp.pad(ben, (0, ben_pad_rows * _LANES - m),
                       constant_values=-jnp.inf).reshape(ben_pad_rows, _LANES)

    params = jnp.stack([
        jnp.asarray(benchmark_floor, jnp.float32),
        jnp.asarray(benchmark_ceil_raw, jnp.float32),
        jnp.asarray(alpha, jnp.float32),
        jnp.asarray(beta, jnp.float32),
    ])

    kernel = functools.partial(_scaling_law_kernel,
                               n_valid=n, t_cap=t_cap, t_bench=t_bench)

    out = pl.pallas_call(
        kernel,
        out_shape=jax.ShapeDtypeStruct((cap_pad_rows, _LANES), jnp.float32),
        grid=(2, t_total),
        in_specs=[
            # [floor, ceil_raw, alpha, beta] — resident scalars.
            pl.BlockSpec(memory_space=pltpu.SMEM),
            # Benchmark tiles: streamed during sweep 0, parked on the last tile in sweep 1.
            pl.BlockSpec(
                (ben_rows, _LANES),
                lambda s, t: (jnp.minimum(t * (1 - s) + (t_bench - 1) * s, t_bench - 1), 0)),
            # Capability tiles: streamed on both sweeps (clamped for any trailing bench tiles).
            pl.BlockSpec(
                (cap_rows, _LANES),
                lambda s, t: (jnp.minimum(t, t_cap - 1), 0)),
        ],
        # Output stays parked on block 0 during sweep 0 (never written back with junk,
        # since the block index only changes inside sweep 1 after real data is written).
        out_specs=pl.BlockSpec(
            (cap_rows, _LANES),
            lambda s, t: (s * jnp.minimum(t, t_cap - 1), 0)),
        scratch_shapes=[
            pltpu.VMEM((cap_rows, _LANES), jnp.float32),   # running sum
            pltpu.VMEM((cap_rows, _LANES), jnp.float32),   # running sum of squares
            pltpu.VMEM((ben_rows, _LANES), jnp.float32),   # running benchmark max
            pltpu.VMEM((1, 1), jnp.float32),               # scale = beta / std
            pltpu.VMEM((1, 1), jnp.float32),               # bias  = alpha - mean * scale
            pltpu.VMEM((1, 1), jnp.float32),               # span  = ceil - floor
        ],
        compiler_params=pltpu.CompilerParams(
            # The tile axis carries a sequential reduction during sweep 0, so both axes
            # stay "arbitrary".
            # TODO(synk): on v7x, core-split the elementwise sweep across the 2 TensorCores
            # with a small cross-core combine of the reduction.
            dimension_semantics=("arbitrary", "arbitrary")),
    )(params, ben_slab, cap_slab)

    return out.reshape(-1)[:n]


def _reference_forward(capability_scores, benchmark_scores, floor, ceil_raw, alpha, beta):
    cap = capability_scores.astype(jnp.float32)
    ben = benchmark_scores.astype(jnp.float32)
    mean = jnp.mean(cap)
    std = jnp.std(cap, ddof=1)
    min_ceil = jnp.clip(jnp.max(ben), 0.8, 1.0)
    ceil = (1.0 - min_ceil) * jax.nn.sigmoid(ceil_raw) + min_ceil
    logit = beta * (cap - mean) / std + alpha
    return (ceil - floor) * jax.nn.sigmoid(logit) + floor


if __name__ == "__main__":
    key = jax.random.PRNGKey(0)
    k1, k2, k3, k4 = jax.random.split(key, 4)

    # Parameters exactly as in ScalingLaw.__init__
    benchmark_floor = jnp.float32(0.25)      # `floor` ctor argument
    benchmark_ceil_raw = jnp.float32(1.0)    # nn.Parameter(torch.tensor(1.))
    alpha = jnp.float32(0.0)                 # nn.Parameter(torch.tensor(0.))
    beta = jnp.float32(1.0)                  # nn.Parameter(torch.tensor(1.))

    # Case 1: typical ScalingLaw size (a handful of models) — single tile, two grid steps.
    N1 = 8
    cap1 = jax.random.normal(k1, (N1,), dtype=jnp.float32) * 2.0 + 1.0
    ben1 = jax.random.uniform(k2, (N1,), dtype=jnp.float32, minval=0.2, maxval=0.95)
    out1 = jax.block_until_ready(
        scaling_law_forward(cap1, ben1, benchmark_floor, benchmark_ceil_raw, alpha, beta))
    ref1 = _reference_forward(cap1, ben1, benchmark_floor, benchmark_ceil_raw, alpha, beta)
    assert out1.shape == (N1,)
    assert jnp.allclose(out1, ref1, atol=3e-5, rtol=3e-5), (out1, ref1)

    # Case 2: force the streamed multi-tile path (tiny 8-row tiles) to exercise the
    # pipelined reduce sweep, the ragged zero-padding, and the clamped index maps.
    N2 = 2000
    cap2 = jax.random.normal(k3, (N2,), dtype=jnp.float32) * 1.5 - 0.5
    ben2 = jax.random.uniform(k4, (N2,), dtype=jnp.float32, minval=0.1, maxval=0.9)
    out2 = jax.block_until_ready(
        scaling_law_forward(cap2, ben2, benchmark_floor, benchmark_ceil_raw, alpha, beta,
                            max_tile_rows=8))
    ref2 = _reference_forward(cap2, ben2, benchmark_floor, benchmark_ceil_raw, alpha, beta)
    assert out2.shape == (N2,)
    assert jnp.allclose(out2, ref2, atol=3e-5, rtol=3e-5), (out2, ref2)

    print("KERNEL_OK")
</pallas_src>

<mosaic_0001>
module attributes {stable_mosaic.version = 11 : i64} {
  func.func @_scaling_law_kernel(%arg0: i32, %arg1: i32, %arg2: memref<4xf32, #tpu.memory_space<smem>>, %arg3: memref<8x128xf32, #tpu.memory_space<vmem>>, %arg4: memref<8x128xf32, #tpu.memory_space<vmem>>, %arg5: memref<8x128xf32, #tpu.memory_space<vmem>>, %arg6: memref<8x128xf32, #tpu.memory_space<vmem>>, %arg7: memref<8x128xf32, #tpu.memory_space<vmem>>, %arg8: memref<8x128xf32, #tpu.memory_space<vmem>>, %arg9: memref<1x1xf32, #tpu.memory_space<vmem>>, %arg10: memref<1x1xf32, #tpu.memory_space<vmem>>, %arg11: memref<1x1xf32, #tpu.memory_space<vmem>>) attributes {dimension_semantics = [#tpu.dimension_semantics<arbitrary>, #tpu.dimension_semantics<arbitrary>], iteration_bounds = array<i64: 2, 1>, scalar_prefetch = 0 : i64, scratch_operands = 6 : i64, tpu.core_type = #tpu.core_type<tc>, window_params = [{transform_indices = @transform_0, window_bounds = array<i64: 4>}, {transform_indices = @transform_1, window_bounds = array<i64: 8, 128>}, {transform_indices = @transform_2, window_bounds = array<i64: 8, 128>}, {transform_indices = @transform_3, window_bounds = array<i64: 8, 128>}]} {
    %c0 = arith.constant 0 : index
    %0 = memref.load %arg2[%c0] : memref<4xf32, #tpu.memory_space<smem>>
    %c1 = arith.constant 1 : index
    %1 = memref.load %arg2[%c1] : memref<4xf32, #tpu.memory_space<smem>>
    %c2 = arith.constant 2 : index
    %2 = memref.load %arg2[%c2] : memref<4xf32, #tpu.memory_space<smem>>
    %c3 = arith.constant 3 : index
    %3 = memref.load %arg2[%c3] : memref<4xf32, #tpu.memory_space<smem>>
    %c0_i32 = arith.constant 0 : i32
    %4 = arith.cmpi eq, %arg0, %c0_i32 : i32
    %5 = arith.extui %4 : i1 to i32
    %c0_i32_0 = arith.constant 0 : i32
    %6 = arith.cmpi ne, %5, %c0_i32_0 : i32
    scf.if %6 {
      %c0_i32_2 = arith.constant 0 : i32
      %10 = arith.cmpi eq, %arg1, %c0_i32_2 : i32
      %11 = arith.extui %10 : i1 to i32
      %c0_i32_3 = arith.constant 0 : i32
      %12 = arith.cmpi ne, %11, %c0_i32_3 : i32
      scf.if %12 {
        %cst = arith.constant 0.000000e+00 : f32
        %22 = vector.broadcast %cst : f32 to vector<8x128xf32>
        %c0_10 = arith.constant 0 : index
        %c0_11 = arith.constant 0 : index
        %23 = vector.load %arg6[%c0_10, %c0_11] : memref<8x128xf32, #tpu.memory_space<vmem>>, vector<8x128xf32>
        tpu.vector_store %arg6[%c0_10, %c0_11], %22 {strides = array<i32>} : memref<8x128xf32, #tpu.memory_space<vmem>>, vector<8x128xf32>,
        %cst_12 = arith.constant 0.000000e+00 : f32
        %24 = vector.broadcast %cst_12 : f32 to vector<8x128xf32>
        %c0_13 = arith.constant 0 : index
        %c0_14 = arith.constant 0 : index
        %25 = vector.load %arg7[%c0_13, %c0_14] : memref<8x128xf32, #tpu.memory_space<vmem>>, vector<8x128xf32>
        tpu.vector_store %arg7[%c0_13, %c0_14], %24 {strides = array<i32>} : memref<8x128xf32, #tpu.memory_space<vmem>>, vector<8x128xf32>,
        %cst_15 = arith.constant 0xFF800000 : f32
        %26 = vector.broadcast %cst_15 : f32 to vector<8x128xf32>
        %c0_16 = arith.constant 0 : index
        %c0_17 = arith.constant 0 : index
        %27 = vector.load %arg8[%c0_16, %c0_17] : memref<8x128xf32, #tpu.memory_space<vmem>>, vector<8x128xf32>
        tpu.vector_store %arg8[%c0_16, %c0_17], %26 {strides = array<i32>} : memref<8x128xf32, #tpu.memory_space<vmem>>, vector<8x128xf32>,
      } else {
      }
      %c1_i32_4 = arith.constant 1 : i32
      %13 = arith.cmpi slt, %arg1, %c1_i32_4 : i32
      %14 = arith.extui %13 : i1 to i32
      %c0_i32_5 = arith.constant 0 : i32
      %15 = arith.cmpi ne, %14, %c0_i32_5 : i32
      scf.if %15 {
        %c0_10 = arith.constant 0 : index
        %c0_11 = arith.constant 0 : index
        %22 = vector.load %arg4[%c0_10, %c0_11] : memref<8x128xf32, #tpu.memory_space<vmem>>, vector<8x128xf32>
        %c0_12 = arith.constant 0 : index
        %c0_13 = arith.constant 0 : index
        %23 = vector.load %arg6[%c0_12, %c0_13] : memref<8x128xf32, #tpu.memory_space<vmem>>, vector<8x128xf32>
        %24 = arith.addf %23, %22 : vector<8x128xf32>
        %c0_14 = arith.constant 0 : index
        %c0_15 = arith.constant 0 : index
        %25 = vector.load %arg6[%c0_14, %c0_15] : memref<8x128xf32, #tpu.memory_space<vmem>>, vector<8x128xf32>
        tpu.vector_store %arg6[%c0_14, %c0_15], %24 {strides = array<i32>} : memref<8x128xf32, #tpu.memory_space<vmem>>, vector<8x128xf32>,
        %c0_16 = arith.constant 0 : index
        %c0_17 = arith.constant 0 : index
        %26 = vector.load %arg7[%c0_16, %c0_17] : memref<8x128xf32, #tpu.memory_space<vmem>>, vector<8x128xf32>
        %27 = arith.mulf %22, %22 : vector<8x128xf32>
        %28 = arith.addf %26, %27 : vector<8x128xf32>
        %c0_18 = arith.constant 0 : index
        %c0_19 = arith.constant 0 : index
        %29 = vector.load %arg7[%c0_18, %c0_19] : memref<8x128xf32, #tpu.memory_space<vmem>>, vector<8x128xf32>
        tpu.vector_store %arg7[%c0_18, %c0_19], %28 {strides = array<i32>} : memref<8x128xf32, #tpu.memory_space<vmem>>, vector<8x128xf32>,
      } else {
      }
      %c1_i32_6 = arith.constant 1 : i32
      %16 = arith.cmpi slt, %arg1, %c1_i32_6 : i32
      %17 = arith.extui %16 : i1 to i32
      %c0_i32_7 = arith.constant 0 : i32
      %18 = arith.cmpi ne, %17, %c0_i32_7 : i32
      scf.if %18 {
        %c0_10 = arith.constant 0 : index
        %c0_11 = arith.constant 0 : index
        %22 = vector.load %arg8[%c0_10, %c0_11] : memref<8x128xf32, #tpu.memory_space<vmem>>, vector<8x128xf32>
        %c0_12 = arith.constant 0 : index
        %c0_13 = arith.constant 0 : index
        %23 = vector.load %arg3[%c0_12, %c0_13] : memref<8x128xf32, #tpu.memory_space<vmem>>, vector<8x128xf32>
        %24 = arith.maximumf %22, %23 : vector<8x128xf32>
        %c0_14 = arith.constant 0 : index
        %c0_15 = arith.constant 0 : index
        %25 = vector.load %arg8[%c0_14, %c0_15] : memref<8x128xf32, #tpu.memory_space<vmem>>, vector<8x128xf32>
        tpu.vector_store %arg8[%c0_14, %c0_15], %24 {strides = array<i32>} : memref<8x128xf32, #tpu.memory_space<vmem>>, vector<8x128xf32>,
      } else {
      }
      %c0_i32_8 = arith.constant 0 : i32
      %19 = arith.cmpi eq, %arg1, %c0_i32_8 : i32
      %20 = arith.extui %19 : i1 to i32
      %c0_i32_9 = arith.constant 0 : i32
      %21 = arith.cmpi ne, %20, %c0_i32_9 : i32
      scf.if %21 {
        %c0_10 = arith.constant 0 : index
        %c0_11 = arith.constant 0 : index
        %22 = vector.load %arg6[%c0_10, %c0_11] : memref<8x128xf32, #tpu.memory_space<vmem>>, vector<8x128xf32>
        %23 = vector.shape_cast %22 : vector<8x128xf32> to vector<1x8x128xf32>
        %cst = arith.constant dense<0.000000e+00> : vector<1xf32>
        %24 = vector.multi_reduction <add>, %23, %cst [1, 2] : vector<1x8x128xf32> to vector<1xf32>
        %25 = vector.shape_cast %24 : vector<1xf32> to vector<1x1x1xf32>
        %26 = vector.extract %25[0, 0, 0] : f32 from vector<1x1x1xf32>
        %27 = vector.broadcast %26 : f32 to vector<1x1xf32>
        %c0_12 = arith.constant 0 : index
        %c0_13 = arith.constant 0 : index
        %28 = vector.load %arg7[%c0_12, %c0_13] : memref<8x128xf32, #tpu.memory_space<vmem>>, vector<8x128xf32>
        %29 = vector.shape_cast %28 : vector<8x128xf32> to vector<1x8x128xf32>
        %cst_14 = arith.constant dense<0.000000e+00> : vector<1xf32>
        %30 = vector.multi_reduction <add>, %29, %cst_14 [1, 2] : vector<1x8x128xf32> to vector<1xf32>
        %31 = vector.shape_cast %30 : vector<1xf32> to vector<1x1x1xf32>
        %32 = vector.extract %31[0, 0, 0] : f32 from vector<1x1x1xf32>
        %33 = vector.broadcast %32 : f32 to vector<1x1xf32>
        %c0_15 = arith.constant 0 : index
        %c0_16 = arith.constant 0 : index
        %34 = vector.load %arg8[%c0_15, %c0_16] : memref<8x128xf32, #tpu.memory_space<vmem>>, vector<8x128xf32>
        %35 = vector.shape_cast %34 : vector<8x128xf32> to vector<1x8x128xf32>
        %cst_17 = arith.constant dense<0xFF800000> : vector<1xf32>
        %36 = vector.multi_reduction <maximumf>, %35, %cst_17 [1, 2] : vector<1x8x128xf32> to vector<1xf32>
        %37 = vector.shape_cast %36 : vector<1xf32> to vector<1x1x1xf32>
        %38 = vector.extract %37[0, 0, 0] : f32 from vector<1x1x1xf32>
        %39 = vector.broadcast %38 : f32 to vector<1x1xf32>
        %cst_18 = arith.constant 8.000000e+00 : f32
        %40 = vector.broadcast %cst_18 : f32 to vector<1x1xf32>
        %41 = arith.divf %27, %40 : vector<1x1xf32>
        %cst_19 = arith.constant 8.000000e+00 : f32
        %42 = vector.broadcast %cst_19 : f32 to vector<1x1xf32>
        %43 = arith.mulf %42, %41 : vector<1x1xf32>
        %44 = arith.mulf %43, %41 : vector<1x1xf32>
        %45 = arith.subf %33, %44 : vector<1x1xf32>
        %cst_20 = arith.constant 0.000000e+00 : f32
        %46 = vector.broadcast %cst_20 : f32 to vector<1x1xf32>
        %47 = arith.maximumf %45, %46 : vector<1x1xf32>
        %cst_21 = arith.constant 8.000000e+00 : f32
        %cst_22 = arith.constant 1.000000e+00 : f32
        %48 = arith.subf %cst_21, %cst_22 : f32
        %49 = vector.broadcast %48 : f32 to vector<1x1xf32>
        %50 = arith.divf %47, %49 : vector<1x1xf32>
        %51 = math.sqrt %50 : vector<1x1xf32>
        %cst_23 = arith.constant 1.000000e+00 : f32
        %52 = vector.broadcast %cst_23 : f32 to vector<1x1xf32>
        %53 = arith.divf %52, %51 : vector<1x1xf32>
        %cst_24 = arith.constant 8.000000e-01 : f32
        %cst_25 = arith.constant 1.000000e+00 : f32
        %54 = vector.broadcast %cst_24 : f32 to vector<1x1xf32>
        %55 = arith.maximumf %54, %39 : vector<1x1xf32>
        %56 = vector.broadcast %cst_25 : f32 to vector<1x1xf32>
        %57 = arith.minimumf %56, %55 : vector<1x1xf32>
        %cst_26 = arith.constant 1.000000e+00 : f32
        %58 = vector.broadcast %cst_26 : f32 to vector<1x1xf32>
        %59 = arith.subf %58, %57 : vector<1x1xf32>
        %60 = vector.broadcast %1 : f32 to vector<1x1xf32>
        %61 = arith.negf %60 : vector<1x1xf32>
        %62 = math.exp %61 : vector<1x1xf32>
        %cst_27 = arith.constant 1.000000e+00 : f32
        %63 = vector.broadcast %cst_27 : f32 to vector<1x1xf32>
        %64 = arith.addf %63, %62 : vector<1x1xf32>
        %65 = arith.divf %63, %64 : vector<1x1xf32>
        %66 = arith.mulf %59, %65 : vector<1x1xf32>
        %67 = arith.addf %66, %57 : vector<1x1xf32>
        %68 = vector.broadcast %3 : f32 to vector<1x1xf32>
        %69 = arith.mulf %68, %53 : vector<1x1xf32>
        %c0_28 = arith.constant 0 : index
        %c0_29 = arith.constant 0 : index
        %70 = vector.load %arg9[%c0_28, %c0_29] : memref<1x1xf32, #tpu.memory_space<vmem>>, vector<1x1xf32>
        tpu.vector_store %arg9[%c0_28, %c0_29], %69 {strides = array<i32>} : memref<1x1xf32, #tpu.memory_space<vmem>>, vector<1x1xf32>,
        %71 = arith.mulf %41, %69 : vector<1x1xf32>
        %72 = vector.broadcast %2 : f32 to vector<1x1xf32>
        %73 = arith.subf %72, %71 : vector<1x1xf32>
        %c0_30 = arith.constant 0 : index
        %c0_31 = arith.constant 0 : index
        %74 = vector.load %arg10[%c0_30, %c0_31] : memref<1x1xf32, #tpu.memory_space<vmem>>, vector<1x1xf32>
        tpu.vector_store %arg10[%c0_30, %c0_31], %73 {strides = array<i32>} : memref<1x1xf32, #tpu.memory_space<vmem>>, vector<1x1xf32>,
        %75 = vector.broadcast %0 : f32 to vector<1x1xf32>
        %76 = arith.subf %67, %75 : vector<1x1xf32>
        %c0_32 = arith.constant 0 : index
        %c0_33 = arith.constant 0 : index
        %77 = vector.load %arg11[%c0_32, %c0_33] : memref<1x1xf32, #tpu.memory_space<vmem>>, vector<1x1xf32>
        tpu.vector_store %arg11[%c0_32, %c0_33], %76 {strides = array<i32>} : memref<1x1xf32, #tpu.memory_space<vmem>>, vector<1x1xf32>,
      } else {
      }
    } else {
    }
    %c1_i32 = arith.constant 1 : i32
    %7 = arith.cmpi eq, %arg0, %c1_i32 : i32
    %8 = arith.extui %7 : i1 to i32
    %c0_i32_1 = arith.constant 0 : i32
    %9 = arith.cmpi ne, %8, %c0_i32_1 : i32
    scf.if %9 {
      %c0_2 = arith.constant 0 : index
      %c0_3 = arith.constant 0 : index
      %10 = vector.load %arg4[%c0_2, %c0_3] : memref<8x128xf32, #tpu.memory_space<vmem>>, vector<8x128xf32>
      %c0_4 = arith.constant 0 : index
      %c0_5 = arith.constant 0 : index
      %11 = vector.load %arg9[%c0_4, %c0_5] : memref<1x1xf32, #tpu.memory_space<vmem>>, vector<1x1xf32>
      %12 = vector.broadcast %11 : vector<1x1xf32> to vector<8x128xf32>
      %13 = arith.mulf %12, %10 : vector<8x128xf32>
      %c0_6 = arith.constant 0 : index
      %c0_7 = arith.constant 0 : index
      %14 = vector.load %arg10[%c0_6, %c0_7] : memref<1x1xf32, #tpu.memory_space<vmem>>, vector<1x1xf32>
      %15 = vector.broadcast %14 : vector<1x1xf32> to vector<8x128xf32>
      %16 = arith.addf %13, %15 : vector<8x128xf32>
      %c0_8 = arith.constant 0 : index
      %c0_9 = arith.constant 0 : index
      %17 = vector.load %arg11[%c0_8, %c0_9] : memref<1x1xf32, #tpu.memory_space<vmem>>, vector<1x1xf32>
      %18 = arith.negf %16 : vector<8x128xf32>
      %19 = math.exp %18 : vector<8x128xf32>
      %cst = arith.constant 1.000000e+00 : f32
      %20 = vector.broadcast %cst : f32 to vector<8x128xf32>
      %21 = arith.addf %20, %19 : vector<8x128xf32>
      %22 = arith.divf %20, %21 : vector<8x128xf32>
      %23 = vector.broadcast %17 : vector<1x1xf32> to vector<8x128xf32>
      %24 = arith.mulf %23, %22 : vector<8x128xf32>
      %25 = vector.broadcast %0 : f32 to vector<8x128xf32>
      %26 = arith.addf %24, %25 : vector<8x128xf32>
      %c0_10 = arith.constant 0 : index
      %c0_11 = arith.constant 0 : index
      %27 = vector.load %arg5[%c0_10, %c0_11] : memref<8x128xf32, #tpu.memory_space<vmem>>, vector<8x128xf32>
      tpu.vector_store %arg5[%c0_10, %c0_11], %26 {strides = array<i32>} : memref<8x128xf32, #tpu.memory_space<vmem>>, vector<8x128xf32>,
    } else {
    }
    return
  }
  func.func @transform_0(%arg0: i32, %arg1: i32) -> i32 {
    %c0_i32 = arith.constant 0 : i32
    %c0_i32_0 = arith.constant 0 : i32
    return %c0_i32 : i32
  }
  func.func @transform_1(%arg0: i32, %arg1: i32) -> (i32, i32) {
    %c1_i32 = arith.constant 1 : i32
    %0 = arith.subi %c1_i32, %arg0 : i32
    %1 = arith.muli %arg1, %0 : i32
    %c0_i32 = arith.constant 0 : i32
    %2 = arith.muli %c0_i32, %arg0 : i32
    %3 = arith.addi %1, %2 : i32
    %c0_i32_0 = arith.constant 0 : i32
    %4 = arith.minsi %3, %c0_i32_0 : i32
    %c0_i32_1 = arith.constant 0 : i32
    %c0_i32_2 = arith.constant 0 : i32
    return %4, %c0_i32_1 : i32, i32
  }
  func.func @transform_2(%arg0: i32, %arg1: i32) -> (i32, i32) {
    %c0_i32 = arith.constant 0 : i32
    %0 = arith.minsi %arg1, %c0_i32 : i32
    %c0_i32_0 = arith.constant 0 : i32
    %c0_i32_1 = arith.constant 0 : i32
    return %0, %c0_i32_0 : i32, i32
  }
  func.func @transform_3(%arg0: i32, %arg1: i32) -> (i32, i32) {
    %c0_i32 = arith.constant 0 : i32
    %0 = arith.minsi %arg1, %c0_i32 : i32
    %1 = arith.muli %arg0, %0 : i32
    %c0_i32_0 = arith.constant 0 : i32
    %c0_i32_1 = arith.constant 0 : i32
    return %1, %c0_i32_0 : i32, i32
  }
}

</mosaic_0001>

<llo_original>
// kernel: tpu_custom_call.1
$region0: #{tpu_custom_call.1}
  #allocation0 [shape = 'u32[]', space=smem, size = 0x4, offset = 0x4, fixed_abs, tag = 'smem constant byte address 0x4 - core index']
  #allocation1 [shape = 'u32[72,128]{1,0:T(1,128)}', space=vmem, size = 0x9000, scoped, tag = 'internal scratch']
  #allocation2 [shape = 'f32[8,128]{1,0:T(8,128)}', space=vmem, size = 0x1000, scoped, tag = 'scratch operand']
  #allocation3 [shape = 'f32[8,128]{1,0:T(8,128)}', space=vmem, size = 0x1000, scoped, tag = 'scratch operand']
  #allocation4 [shape = 'f32[8,128]{1,0:T(8,128)}', space=vmem, size = 0x1000, scoped, tag = 'scratch operand']
  #allocation5 [shape = 'f32[1,1]{1,0:T(1,128)}', space=vmem, size = 0x200, scoped, tag = 'scratch operand']
  #allocation6 [shape = 'f32[1,1]{1,0:T(1,128)}', space=vmem, size = 0x200, scoped, tag = 'scratch operand']
  #allocation7 [shape = 'f32[1,1]{1,0:T(1,128)}', space=vmem, size = 0x200, scoped, tag = 'scratch operand']
  %s0 = inlined_call_operand.hbm [shape: f32[4], index: 0, kind: input, shape index: {}]
  %s1 = inlined_call_operand.hbm [shape: f32[8,128], index: 1, kind: input, shape index: {}]
  %s2 = inlined_call_operand.hbm [shape: f32[8,128], index: 2, kind: input, shape index: {}]
  %s3 = inlined_call_operand.hbm [shape: f32[8,128], index: 3, kind: output, shape index: {}]
  %s4 = sld [smem:[#allocation0]]
  $region77: #{tpu_custom_call.1} parent=0
    _
  %s6 = ssub.s32 1, %s4
  %s7 = scalar_select 0, %s6, %s4
  $region1: #{tpu_custom_call.1} parent=0
    #allocation8 [shape = 'u8[512]{0}', space=smem, size = 0x200, scoped, tag = 'input window, operand 0, single buffered']
    #allocation9 [shape = 's32[2]{0}', space=sflag, size = 0x8, scoped, tag = 'scoped memory for tpu_custom_call.1']
    #allocation10 [shape = 's32[2]{0}', space=sflag, size = 0x8, scoped, tag = 'scoped memory for tpu_custom_call.1']
    #allocation11 [shape = 's32[2]{0}', space=sflag, size = 0x8, scoped, tag = 'scoped memory for tpu_custom_call.1']
    #allocation12 [shape = 'u8[8192]{0}', space=vmem, size = 0x2000, scoped, tag = 'input window, operand 1']
    #allocation13 [shape = 'u8[4096]{0}', space=vmem, size = 0x1000, scoped, tag = 'input window, operand 2, single buffered']
    #allocation14 [shape = 's32[1]{0}', space=sflag, size = 0x4, scoped, tag = 'scoped memory for tpu_custom_call.1']
    #allocation15 [shape = 'u8[8192]{0}', space=vmem, size = 0x2000, scoped, tag = 'output window, operand 0']
    %8 = vsyncpa [#allocation11], 0
    %9 = vsyncpa [#allocation9], 0
    %s10 = scalar_lea.sflag [#allocation9], 1
    %11 = vsyncpa %s10, 0
    %12 = vsyncpa [#allocation14], 0
    %13 = vsyncpa [#allocation10], 0
    %s14 = scalar_lea.sflag [#allocation10], 1
    %15 = vsyncpa %s14, 0
    loop: start=0, step=1, limit=4
    $region2: #{tpu_custom_call.1} parent=1 // loop_pre_header
      _
    $region3: #{tpu_custom_call.1} parent=1 // loop_header
      %s17 = sphi 0, %s21
      %p18 = scmp.ge.s32.totalorder %s17, 4
      %s24 = sphi 0, %s36
      %s25 = sphi 0, %s32
      %s26 = sphi 0, %s24
      %s27 = sphi 0, %s25
      %s28 = sphi 0, %s26
      %s29 = sphi 0, %s27
      %s37 = sphi 0, %s37
      %s39 = sphi 0, %s37
      %s40 = sphi 0, %s39
      %s54 = sphi 0, %s40
      %s68 = sphi 0, %s70
      %s71 = sphi 0, %s68
      %s72 = sphi 0, %s71
      %s88 = sphi 0, %s72
      %s98 = sphi 0, %s100
      %s101 = sphi 0, %s98
      %s102 = sphi 0, %s101
      %s118 = sphi 0, %s102
      %s130 = sphi 0, %s132
      %s133 = sphi 0, %s130
      %s134 = sphi 0, %s133
      %s150 = sphi 0, %s134
    $region4: #{tpu_custom_call.1} parent=1 // loop_header_branch
      %20 = sbr.rel (%p18) target = $region8
    $region5: #{tpu_custom_call.1} parent=1 // loop_body
      %s22 = ssub.s32 %s17, 1
      %s23 = ssub.s32 %s17, 2
      %s30 = sadd.s32 1, %s25
      %p31 = scmp.ge.s32.totalorder %s30, 1
      %s32 = scalar_select %p31, 0, %s30
      %s33 = sadd.s32 1, %s24
      %s34 = scalar_select %p31, %s33, %s24
      %p35 = scmp.ge.s32.totalorder %s34, 2
      %s36 = scalar_select %p35, 0, %s34
      %s38 = sadd.s32 %s37, 1
      %p41 = scmp.eq.s32.totalorder %s17, 1
      %p42 = scmp.ne.s32.totalorder %s37, %s39
      %p43 = scmp.eq.s32.totalorder %s17, 0
      %p44 = por %p42, %p43
      %p45 = scmp.ne.s32.totalorder %s37, %s39
      %p46 = scmp.eq.s32.totalorder %s22, 1
      %p47 = por %p45, %p46
      %p48 = scmp.ne.s32.totalorder %s39, %s40
      %p49 = scmp.eq.s32.totalorder %s22, 0
      %p50 = por %p48, %p49
      %p51 = scmp.ne.s32.totalorder %s39, %s40
      %p52 = scmp.eq.s32.totalorder %s23, 1
      %p53 = por %p51, %p52
      %p55 = scmp.ne.s32.totalorder %s40, %s54
      %p56 = scmp.eq.s32.totalorder %s23, 0
      %p57 = por %p55, %p56
      %s58 = ssub.s32 1, %s24
      %s59 = smul.u32 %s25, %s58
      %p60 = scmp.lt.s32.totalorder %s59, 0
      %s61 = scalar_select %p60, %s59, 0
      %s62 = ssub.s32 1, %s36
      %s63 = smul.u32 %s32, %s62
      %p64 = scmp.lt.s32.totalorder %s63, 0
      %s65 = scalar_select %p64, %s63, 0
      %s66 = ssub.s32 %s61, %s65
      %p67 = scmp.eq.s32.totalorder %s66, 0
      %s69 = sadd.s32 %s68, 1
      %s70 = scalar_select %p67, %s68, %s69
      %p73 = pneg %p67
      %p74 = scmp.eq.s32.totalorder %s17, 1
      %p75 = por %p73, %p74
      %p76 = scmp.ne.s32.totalorder %s68, %s71
      %p77 = scmp.eq.s32.totalorder %s17, 0
      %p78 = por %p76, %p77
      %p79 = scmp.ne.s32.totalorder %s68, %s71
      %p80 = scmp.eq.s32.totalorder %s22, 1
      %p81 = por %p79, %p80
      %p82 = scmp.ne.s32.totalorder %s71, %s72
      %p83 = scmp.eq.s32.totalorder %s22, 0
      %p84 = por %p82, %p83
      %p85 = scmp.ne.s32.totalorder %s71, %s72
      %p86 = scmp.eq.s32.totalorder %s23, 1
      %p87 = por %p85, %p86
      %p89 = scmp.ne.s32.totalorder %s72, %s88
      %p90 = scmp.eq.s32.totalorder %s23, 0
      %p91 = por %p89, %p90
      %p92 = scmp.lt.s32.totalorder %s25, 0
      %s93 = scalar_select %p92, %s25, 0
      %p94 = scmp.lt.s32.totalorder %s32, 0
      %s95 = scalar_select %p94, %s32, 0
      %s96 = ssub.s32 %s93, %s95
      %p97 = scmp.eq.s32.totalorder %s96, 0
      %s99 = sadd.s32 %s98, 1
      %s100 = scalar_select %p97, %s98, %s99
      %p103 = pneg %p97
      %p104 = scmp.eq.s32.totalorder %s17, 1
      %p105 = por %p103, %p104
      %p106 = scmp.ne.s32.totalorder %s98, %s101
      %p107 = scmp.eq.s32.totalorder %s17, 0
      %p108 = por %p106, %p107
      %p109 = scmp.ne.s32.totalorder %s98, %s101
      %p110 = scmp.eq.s32.totalorder %s22, 1
      %p111 = por %p109, %p110
      %p112 = scmp.ne.s32.totalorder %s101, %s102
      %p113 = scmp.eq.s32.totalorder %s22, 0
      %p114 = por %p112, %p113
      %p115 = scmp.ne.s32.totalorder %s101, %s102
      %p116 = scmp.eq.s32.totalorder %s23, 1
      %p117 = por %p115, %p116
      %p119 = scmp.ne.s32.totalorder %s102, %s118
      %p120 = scmp.eq.s32.totalorder %s23, 0
      %p121 = por %p119, %p120
      %p122 = scmp.lt.s32.totalorder %s25, 0
      %s123 = scalar_select %p122, %s25, 0
      %s124 = smul.u32 %s24, %s123
      %p125 = scmp.lt.s32.totalorder %s32, 0
      %s126 = scalar_select %p125, %s32, 0
      %s127 = smul.u32 %s36, %s126
      %s128 = ssub.s32 %s124, %s127
      %p129 = scmp.eq.s32.totalorder %s128, 0
      %s131 = sadd.s32 %s130, 1
      %s132 = scalar_select %p129, %s130, %s131
      %p135 = pneg %p129
      %p136 = scmp.eq.s32.totalorder %s17, 1
      %p137 = por %p135, %p136
      %p138 = scmp.ne.s32.totalorder %s130, %s133
      %p139 = scmp.eq.s32.totalorder %s17, 0
      %p140 = por %p138, %p139
      %p141 = scmp.ne.s32.totalorder %s130, %s133
      %p142 = scmp.eq.s32.totalorder %s22, 1
      %p143 = por %p141, %p142
      %p144 = scmp.ne.s32.totalorder %s133, %s134
      %p145 = scmp.eq.s32.totalorder %s22, 0
      %p146 = por %p144, %p145
      %p147 = scmp.ne.s32.totalorder %s133, %s134
      %p148 = scmp.eq.s32.totalorder %s23, 1
      %p149 = por %p147, %p148
      %p151 = scmp.ne.s32.totalorder %s134, %s150
      %p152 = scmp.eq.s32.totalorder %s23, 0
      %p153 = por %p151, %p152
      %p154 = scmp.le.s32.totalorder 1, %s17
      %p155 = scmp.lt.s32.totalorder %s17, 3
      %p156 = pnand %p154, %p155
      %p157 = pneg %p156
      // Predicated region
      $region9: #{tpu_custom_call.1} parent=5 // pred_check
        _
      $region10: #{tpu_custom_call.1} parent=5 // pred_check_branch
        %159 = sbr.rel (%p156) target = $region12
      $region11: #{tpu_custom_call.1} parent=5 // pred_region
        %s160 = ssub.s32 %s17, 1
        // Predicated region
        $region13: #{tpu_custom_call.1} parent=11 // pred_check
          %p161 = pneg %p50
        $region14: #{tpu_custom_call.1} parent=11 // pred_check_branch
          %163 = sbr.rel (%p161) target = $region16
        $region15: #{tpu_custom_call.1} parent=11 // pred_region
          %165 = vsyncadd [#allocation11], 0
          %s167 = sshll.u32 %s0, 4
          %s168 = int_to_ptr.hbm [resolvable:$true] %s167
          %170 = dma.hbm_to_smem %s168, 16, [#allocation8], [#allocation11]
        $region16: #{tpu_custom_call.1} parent=11 // pred_fallthru
          _
        // Predicated region
        $region17: #{tpu_custom_call.1} parent=11 // pred_check
          %p171 = pneg %p114
        $region18: #{tpu_custom_call.1} parent=11 // pred_check_branch
          %173 = sbr.rel (%p171) target = $region20
        $region19: #{tpu_custom_call.1} parent=11 // pred_region
          %p174 = scmp.lt.s32.totalorder %s27, 0
          %s175 = scalar_select %p174, %s27, 0
          %177 = vsyncadd [#allocation14], 0
          %s178 = smul.addr %s175, 8
          %s179 = scalar_lea.hbm %s2, %s178
          %s181 = sshll.u32 %s179, 4
          %s182 = int_to_ptr.hbm [resolvable:$true] %s181
          %s183 = sshll.u32 [#allocation13], 4
          %s184 = int_to_ptr.vmem [resolvable:$true] %s183
          %186 = dma.hbm_to_vmem [thread:$0]  %s182, 128, %s184, [#allocation14]
        $region20: #{tpu_custom_call.1} parent=11 // pred_fallthru
          _
      $region12: #{tpu_custom_call.1} parent=5 // pred_fallthru
        _
      %p187 = scmp.lt.s32.totalorder %s17, 2
      // Predicated region
      $region21: #{tpu_custom_call.1} parent=5 // pred_check
        %p188 = pneg %p187
      $region22: #{tpu_custom_call.1} parent=5 // pred_check_branch
        %190 = sbr.rel (%p188) target = $region24
      $region23: #{tpu_custom_call.1} parent=5 // pred_region
        // Predicated region
        $region25: #{tpu_custom_call.1} parent=23 // pred_check
          %p191 = pneg %p78
        $region26: #{tpu_custom_call.1} parent=23 // pred_check_branch
          %193 = sbr.rel (%p191) target = $region28
        $region27: #{tpu_custom_call.1} parent=23 // pred_region
          %s194 = sand.u32 %s68, 1
          %s195 = scalar_lea.sflag [#allocation9], %s194
          %s196 = sand.u32 %s68, 1
          %s197 = smul.addr %s196, 8
          %s198 = scalar_lea.vmem [#allocation12], %s197
          %s199 = ssub.s32 1, %s24
          %s200 = smul.u32 %s25, %s199
          %p201 = scmp.lt.s32.totalorder %s200, 0
          %s202 = scalar_select %p201, %s200, 0
          %204 = vsyncadd %s195, 0
          %s205 = smul.addr %s202, 8
          %s206 = scalar_lea.hbm %s1, %s205
          %s208 = sshll.u32 %s206, 4
          %s209 = int_to_ptr.hbm [resolvable:$true] %s208
          %s210 = sshll.u32 %s198, 4
          %s211 = int_to_ptr.vmem [resolvable:$true] %s210
          %213 = dma.hbm_to_vmem [thread:$0]  %s209, 128, %s211, %s195
        $region28: #{tpu_custom_call.1} parent=23 // pred_fallthru
          _
      $region24: #{tpu_custom_call.1} parent=5 // pred_fallthru
        _
      %p214 = scmp.le.s32.totalorder 1, %s17
      %p215 = scmp.lt.s32.totalorder %s17, 3
      %p216 = pnand %p214, %p215
      %p217 = pneg %p216
      // Predicated region
      $region29: #{tpu_custom_call.1} parent=5 // pred_check
        _
      $region30: #{tpu_custom_call.1} parent=5 // pred_check_branch
        %219 = sbr.rel (%p216) target = $region32
      $region31: #{tpu_custom_call.1} parent=5 // pred_region
        %s220 = ssub.s32 %s17, 1
        // Predicated region
        $region33: #{tpu_custom_call.1} parent=31 // pred_check
          %p221 = pneg %p50
        $region34: #{tpu_custom_call.1} parent=31 // pred_check_branch
          %223 = sbr.rel (%p221) target = $region36
        $region35: #{tpu_custom_call.1} parent=31 // pred_region
          %225 = dma.done [#allocation11], 16
        $region36: #{tpu_custom_call.1} parent=31 // pred_fallthru
          _
        %s226 = sand.u32 %s71, 1
        %s227 = scalar_lea.sflag [#allocation9], %s226
        %s228 = sand.u32 %s71, 1
        %s229 = smul.addr %s228, 8
        %s230 = scalar_lea.vmem [#allocation12], %s229
        // Predicated region
        $region37: #{tpu_custom_call.1} parent=31 // pred_check
          %p231 = pneg %p84
        $region38: #{tpu_custom_call.1} parent=31 // pred_check_branch
          %233 = sbr.rel (%p231) target = $region40
        $region39: #{tpu_custom_call.1} parent=31 // pred_region
          %235 = dma.done %s227, 128
        $region40: #{tpu_custom_call.1} parent=31 // pred_fallthru
          _
        // Predicated region
        $region41: #{tpu_custom_call.1} parent=31 // pred_check
          %p236 = pneg %p114
        $region42: #{tpu_custom_call.1} parent=31 // pred_check_branch
          %238 = sbr.rel (%p236) target = $region44
        $region43: #{tpu_custom_call.1} parent=31 // pred_region
          %240 = dma.done [#allocation14], 128
        $region44: #{tpu_custom_call.1} parent=31 // pred_fallthru
          _
        %241 = sfence
        %p242 = pneg %p50
        %p243 = pneg %p47
        %s244 = sand.u32 %s71, 1
        %s245 = scalar_lea.sflag [#allocation9], %s244
        %s246 = sand.u32 %s71, 1
        %s247 = smul.addr %s246, 8
        %s248 = scalar_lea.vmem [#allocation12], %s247
        %p249 = pneg %p84
        %p250 = pneg %p81
        %p251 = pneg %p114
        %p252 = pneg %p111
        %p253 = pneg %p146
        %p254 = pneg %p143
        %s255 = sand.u32 %s133, 1
        %s256 = scalar_lea.sflag [#allocation10], %s255
        %s257 = sand.u32 %s133, 1
        %s258 = smul.addr %s257, 8
        %s259 = scalar_lea.vmem [#allocation15], %s258
        %s260 = ssub.s32 1, %s26
        %s261 = smul.u32 %s27, %s260
        %p262 = scmp.lt.s32.totalorder %s261, 0
        %s263 = scalar_select %p262, %s261, 0
        %p264 = scmp.lt.s32.totalorder %s27, 0
        %s265 = scalar_select %p264, %s27, 0
        %p266 = scmp.lt.s32.totalorder %s27, 0
        %s267 = scalar_select %p266, %s27, 0
        %s268 = smul.u32 %s26, %s267
        %s269 = sld [smem:[#allocation8]]
        %s270 = sld [smem:[#allocation8 + $0x1]]
        %s271 = sld [smem:[#allocation8 + $0x2]]
        %s272 = sld [smem:[#allocation8 + $0x3]]
        %p273 = scmp.eq.s32.totalorder %s26, 0
        // Predicated region
        $region45: #{tpu_custom_call.1} parent=31 // pred_check
          %p274 = pneg %p273
        $region46: #{tpu_custom_call.1} parent=31 // pred_check_branch
          %276 = sbr.rel (%p274) target = $region48
        $region47: #{tpu_custom_call.1} parent=31 // pred_region
          %p277 = scmp.eq.s32.totalorder %s27, 0
          // Predicated region
          $region49: #{tpu_custom_call.1} parent=47 // pred_check
            %p278 = pneg %p277
          $region50: #{tpu_custom_call.1} parent=47 // pred_check_branch
            %280 = sbr.rel (%p278) target = $region52
          $region51: #{tpu_custom_call.1} parent=47 // pred_region
            %281 = vst [vmem:[#allocation2] sm:$0xff] 0.0
            %282 = vst [vmem:[#allocation3] sm:$0xff] 0.0
            %283 = vst [vmem:[#allocation4] sm:$0xff] -inf
          $region52: #{tpu_custom_call.1} parent=47 // pred_fallthru
            _
          %p284 = scmp.lt.s32.totalorder %s27, 1
          // Predicated region
          $region53: #{tpu_custom_call.1} parent=47 // pred_check
            %p285 = pneg %p284
          $region54: #{tpu_custom_call.1} parent=47 // pred_check_branch
            %287 = sbr.rel (%p285) target = $region56
          $region55: #{tpu_custom_call.1} parent=47 // pred_region
            %v288 = vld [vmem:[#allocation13] sm:$0xff]
            %v289 = vld [vmem:[#allocation2] sm:$0xff]
            %v290 = vadd.f32 %v289, %v288
            %291 = vst [vmem:[#allocation2] sm:$0xff] %v290
            %v292 = vld [vmem:[#allocation3] sm:$0xff]
            %v293 = vmul.f32 %v288, %v288
            %v294 = vadd.f32 %v292, %v293
            %295 = vst [vmem:[#allocation3] sm:$0xff] %v294
            %v296 = vld [vmem:[#allocation4] sm:$0xff]
            %v297 = vld [vmem:[%s230] sm:$0xff]
            %v298 = vmax.f32 %v296, %v297
            %299 = vst [vmem:[#allocation4] sm:$0xff] %v298
          $region56: #{tpu_custom_call.1} parent=47 // pred_fallthru
            _
          // Predicated region
          $region57: #{tpu_custom_call.1} parent=47 // pred_check
            %p300 = pneg %p277
          $region58: #{tpu_custom_call.1} parent=47 // pred_check_branch
            %302 = sbr.rel (%p300) target = $region60
          $region59: #{tpu_custom_call.1} parent=47 // pred_region
            %v303 = vld [vmem:[#allocation2] sm:$0xff]
            %304 = vadd.xlane.f32.xlu0 %v303
            %v305 = vpop.xlane.xlu0 %304
            %v306 = vrot.slane %v305, 4
            %v307 = vadd.f32 %v305, %v306
            %v308 = vrot.slane %v307, 2
            %v309 = vadd.f32 %v307, %v308
            %v310 = vrot.slane %v309, 1
            %v311 = vadd.f32 %v309, %v310
            %s312 = vtos %v311
            %v313 = vstv %s312
            %v314 = vld [vmem:[#allocation3] sm:$0xff]
            %315 = vadd.xlane.f32.xlu0 %v314
            %v316 = vpop.xlane.xlu0 %315
            %v317 = vrot.slane %v316, 4
            %v318 = vadd.f32 %v316, %v317
            %v319 = vrot.slane %v318, 2
            %v320 = vadd.f32 %v318, %v319
            %v321 = vrot.slane %v320, 1
            %v322 = vadd.f32 %v320, %v321
            %s323 = vtos %v322
            %v324 = vstv %s323
            %v325 = vld [vmem:[#allocation4] sm:$0xff]
            %326 = vmax.xlane.f32.xlu0 %v325
            %v327 = vpop.xlane.xlu0 %326
            %v328 = vrot.slane %v327, 4
            %v329 = vmax.f32 %v327, %v328
            %v330 = vrot.slane %v329, 2
            %v331 = vmax.f32 %v329, %v330
            %v332 = vrot.slane %v331, 1
            %v333 = vmax.f32 %v331, %v332
            %s334 = vtos %v333
            %v335 = vstv %s334
            %v336 = vrcp.pop 8.0
            %v337 = vmul.f32 8.0, %v336
            %v338 = vsub.f32 1.0, %v337
            %v339 = vmul.f32 %v336, %v338
            %v340 = vadd.f32 %v336, %v339
            %vm341 = vweird.f32 %v336
            %v342 = vsel %vm341, %v336, %v340
            %v343 = vmul.f32 %v313, %v342
            %v344 = vmul.f32 %v343, 8.0
            %v345 = vmul.f32 %v344, %v343
            %v346 = vsub.f32 %v324, %v345
            %v347 = vmax.f32 %v346, 0.0
            %v348 = vrcp.pop 7.0
            %v349 = vmul.f32 7.0, %v348
            %v350 = vsub.f32 1.0, %v349
            %v351 = vmul.f32 %v348, %v350
            %v352 = vadd.f32 %v348, %v351
            %vm353 = vweird.f32 %v348
            %v354 = vsel %vm353, %v348, %v352
            %v355 = vmul.f32 %v347, %v354
            %v356 = vrsqrt.pop %v355
            %v357 = vmul.f32 %v356, %v355
            %v358 = vmul.f32 %v357, %v356
            %v359 = vmul.f32 0.5, %v358
            %v360 = vsub.f32 1.5, %v359
            %v361 = vmul.f32 %v356, %v360
            %v362 = vmul.f32 %v355, %v361
            %vm363 = vcmp.eq.f32.partialorder %v355, inf
            %v364 = vsel %vm363, %v355, %v362
            %vm365 = vcmp.eq.f32.partialorder %v355, 0.0
            %v366 = vand.u32 %v355, 2147483648
            %v367 = vsel %vm365, %v366, %v364
            %v368 = vrcp.pop %v367
            %v369 = vmul.f32 %v367, %v368
            %v370 = vsub.f32 1.0, %v369
            %v371 = vmul.f32 %v368, %v370
            %v372 = vadd.f32 %v368, %v371
            %vm373 = vweird.f32 %v367
            %vm374 = vweird.f32 %v368
            %vm375 = vmor %vm373, %vm374
            %v376 = vsel %vm375, %v368, %v372
            %v377 = vand.u32 2147483647, %v367
            %vm378 = vcmp.eq.f32.partialorder %v377, 8.507059e+37
            %v379 = vand.u32 %v367, 2147483648
            %v380 = vor.u32 1.1754944e-38, %v379
            %v381 = vsel %vm378, %v380, %v376
            %v382 = vmul.f32 1.0, %v381
            %v383 = vmax.f32 %v335, 0.8
            %v384 = vmin.f32 %v383, 1.0
            %v385 = vsub.f32 1.0, %v384
            %v386 = vstv %s270
            %v387 = vxor.u32 %v386, 2147483648
            %v388 = vmul.f32 %v387, 1.442695
            %v389 = vpow.pop %v388
            %v390 = vadd.f32 %v389, 1.0
            %v391 = vrcp.pop %v390
            %v392 = vmul.f32 %v390, %v391
            %v393 = vsub.f32 1.0, %v392
            %v394 = vmul.f32 %v391, %v393
            %v395 = vadd.f32 %v391, %v394
            %vm396 = vweird.f32 %v390
            %vm397 = vweird.f32 %v391
            %vm398 = vmor %vm396, %vm397
            %v399 = vsel %vm398, %v391, %v395
            %v400 = vand.u32 2147483647, %v390
            %vm401 = vcmp.eq.f32.partialorder %v400, 8.507059e+37
            %v402 = vand.u32 %v390, 2147483648
            %v403 = vor.u32 1.1754944e-38, %v402
            %v404 = vsel %vm401, %v403, %v399
            %v405 = vmul.f32 1.0, %v404
            %v406 = vmul.f32 %v385, %v405
            %v407 = vadd.f32 %v406, %v384
            %v408 = vstv %s272
            %v409 = vmul.f32 %v408, %v382
            %vm410 = vcmask 0
            %411 = vst.msk [vmem:[#allocation5] sm:$0x1] %vm410, %v409
            %v412 = vmul.f32 %v343, %v409
            %v413 = vstv %s271
            %v414 = vsub.f32 %v413, %v412
            %415 = vst.msk [vmem:[#allocation6] sm:$0x1] %vm410, %v414
            %v416 = vstv %s269
            %v417 = vsub.f32 %v407, %v416
            %418 = vst.msk [vmem:[#allocation7] sm:$0x1] %vm410, %v417
          $region60: #{tpu_custom_call.1} parent=47 // pred_fallthru
            _
        $region48: #{tpu_custom_call.1} parent=31 // pred_fallthru
          _
        %p419 = scmp.eq.s32.totalorder %s26, 1
        // Predicated region
        $region61: #{tpu_custom_call.1} parent=31 // pred_check
          %p420 = pneg %p419
        $region62: #{tpu_custom_call.1} parent=31 // pred_check_branch
          %422 = sbr.rel (%p420) target = $region64
        $region63: #{tpu_custom_call.1} parent=31 // pred_region
          %v423 = vld [vmem:[#allocation13] sm:$0xff]
          %v424 = vld [vmem:[#allocation5] sm:$0x1]
          %v426 = vperm.slane %v424, 0
          %427 = vset.pattern.permute.xlu0 0
          %428 = vperm.xlu0 %427, %v426
          %v429 = vpop.permute.xlu0 %428
          %v431 = vmul.f32 %v429, %v423
          %v432 = vld [vmem:[#allocation6] sm:$0x1]
          %v434 = vperm.slane %v432, 0
          %435 = vset.pattern.permute.xlu0 0
          %436 = vperm.xlu0 %435, %v434
          %v437 = vpop.permute.xlu0 %436
          %v439 = vadd.f32 %v431, %v437
          %v440 = vld [vmem:[#allocation7] sm:$0x1]
          %v441 = vxor.u32 %v439, 2147483648
          %v442 = vmul.f32 %v441, 1.442695
          %v443 = vpow.pop %v442
          %v444 = vadd.f32 %v443, 1.0
          %v445 = vrcp.pop %v444
          %v446 = vmul.f32 %v444, %v445
          %v447 = vsub.f32 1.0, %v446
          %v448 = vmul.f32 %v445, %v447
          %v449 = vadd.f32 %v445, %v448
          %vm450 = vweird.f32 %v444
          %vm451 = vweird.f32 %v445
          %vm452 = vmor %vm450, %vm451
          %v453 = vsel %vm452, %v445, %v449
          %v454 = vand.u32 2147483647, %v444
          %vm455 = vcmp.eq.f32.partialorder %v454, 8.507059e+37
          %v456 = vand.u32 %v444, 2147483648
          %v457 = vor.u32 1.1754944e-38, %v456
          %v458 = vsel %vm455, %v457, %v453
          %v459 = vmul.f32 1.0, %v458
          %v461 = vperm.slane %v440, 0
          %462 = vset.pattern.permute.xlu0 0
          %463 = vperm.xlu0 %462, %v461
          %v464 = vpop.permute.xlu0 %463
          %v466 = vmul.f32 %v464, %v459
          %v467 = vstv %s269
          %v468 = vadd.f32 %v466, %v467
          %469 = vst [vmem:[%s259] sm:$0xff] %v468
        $region64: #{tpu_custom_call.1} parent=31 // pred_fallthru
          _
        %s470 = sand.u32 %s133, 1
        %s471 = scalar_lea.sflag [#allocation10], %s470
        %s472 = sand.u32 %s133, 1
        %s473 = smul.addr %s472, 8
        %s474 = scalar_lea.vmem [#allocation15], %s473
        // Predicated region
        $region65: #{tpu_custom_call.1} parent=31 // pred_check
          %p475 = pneg %p143
        $region66: #{tpu_custom_call.1} parent=31 // pred_check_branch
          %477 = sbr.rel (%p475) target = $region68
        $region67: #{tpu_custom_call.1} parent=31 // pred_region
          %p478 = scmp.lt.s32.totalorder %s27, 0
          %s479 = scalar_select %p478, %s27, 0
          %s480 = smul.u32 %s26, %s479
          %482 = vsyncadd %s471, 0
          %s483 = smul.addr %s480, 8
          %s484 = scalar_lea.hbm %s3, %s483
          %s486 = sshll.u32 %s474, 4
          %s487 = int_to_ptr.vmem [resolvable:$true] %s486
          %s488 = sshll.u32 %s484, 4
          %s489 = int_to_ptr.hbm [resolvable:$true] %s488
          %491 = dma.vmem_to_hbm [thread:$0]  %s487, 128, %s489, %s471
        $region68: #{tpu_custom_call.1} parent=31 // pred_fallthru
          _
      $region32: #{tpu_custom_call.1} parent=5 // pred_fallthru
        _
      %p492 = scmp.le.s32.totalorder 2, %s17
      // Predicated region
      $region69: #{tpu_custom_call.1} parent=5 // pred_check
        %p493 = pneg %p492
      $region70: #{tpu_custom_call.1} parent=5 // pred_check_branch
        %495 = sbr.rel (%p493) target = $region72
      $region71: #{tpu_custom_call.1} parent=5 // pred_region
        %s496 = ssub.s32 %s17, 2
        // Predicated region
        $region73: #{tpu_custom_call.1} parent=71 // pred_check
          %p497 = pneg %p149
        $region74: #{tpu_custom_call.1} parent=71 // pred_check_branch
          %499 = sbr.rel (%p497) target = $region76
        $region75: #{tpu_custom_call.1} parent=71 // pred_region
          %s500 = sand.u32 %s134, 1
          %s501 = scalar_lea.sflag [#allocation10], %s500
          %s502 = sand.u32 %s134, 1
          %s503 = smul.addr %s502, 8
          %s504 = scalar_lea.vmem [#allocation15], %s503
          %506 = dma.done %s501, 128
        $region76: #{tpu_custom_call.1} parent=71 // pred_fallthru
          _
      $region72: #{tpu_custom_call.1} parent=5 // pred_fallthru
        _
    $region6: #{tpu_custom_call.1} parent=1 // loop_footer
      %s21 = sadd.s32 1, %s17
    $region7: #{tpu_custom_call.1} parent=1 // loop_footer_branch
      %16 = sbr.rel target = $region3
    $region8: #{tpu_custom_call.1} parent=1 // loop_exit
      _
    %507 = vsyncpa [#allocation9], 1
    %s508 = scalar_lea.sflag [#allocation9], 1
    %509 = vsyncpa %s508, 1
    %510 = vsyncpa [#allocation14], 1
    %511 = vsyncpa [#allocation10], 1
    %s512 = scalar_lea.sflag [#allocation10], 1
    %513 = vsyncpa %s512, 1
    %514 = vsyncpa [#allocation11], 1
    %s515 = scalar_lea.sflag [#allocation11], 1
    %516 = vsyncpa %s515, 1

</llo_original>
